<compile_context>
chip_gen: v7x
topology: tpu7x:2x2x1
jax: 0.10.0
libtpu: 0.0.40
codegen_flags: <defaults>
</compile_context>

<pallas_src>
import functools

import jax
import jax.numpy as jnp
from jax.experimental import pallas as pl
from jax.experimental.pallas import tpu as pltpu


# ------------------------------ kernel bodies ------------------------------

def _kernel_fast_res(x_ref, w_ref, b_ref, r_ref, o_ref):
    # Single reduction step (weight-resident 1-D grid or 2-D (M,N) grid).
    y = jnp.dot(x_ref[...], w_ref[...], preferred_element_type=jnp.float32)
    y = y + b_ref[...].astype(jnp.float32) + r_ref[...].astype(jnp.float32)
    o_ref[...] = jnp.maximum(y, 0.0).astype(o_ref.dtype)


def _kernel_fast_nores(x_ref, w_ref, b_ref, o_ref):
    y = jnp.dot(x_ref[...], w_ref[...], preferred_element_type=jnp.float32)
    y = y + b_ref[...].astype(jnp.float32)
    o_ref[...] = jnp.maximum(y, 0.0).astype(o_ref.dtype)


def _kernel_acc_res(x_ref, w_ref, b_ref, r_ref, o_ref, acc_ref):
    # grid = (M//tm, N//tn, K//tk), K axis is the reduction ("arbitrary").
    # Requires num_programs(2) >= 2 (gk == 1 is routed to the fast kernels).
    k = pl.program_id(2)
    nk = pl.num_programs(2)
    partial = jnp.dot(x_ref[...], w_ref[...], preferred_element_type=jnp.float32)

    @pl.when(k == 0)
    def _():
        acc_ref[...] = partial            # init with first partial (no zero fill)

    @pl.when(jnp.logical_and(k > 0, k < nk - 1))
    def _():
        acc_ref[...] += partial

    @pl.when(k == nk - 1)
    def _():
        # Fuse the last partial straight into the epilogue: no acc store+reload.
        y = (acc_ref[...] + partial
             + b_ref[...].astype(jnp.float32)
             + r_ref[...].astype(jnp.float32))
        o_ref[...] = jnp.maximum(y, 0.0).astype(o_ref.dtype)


def _kernel_acc_nores(x_ref, w_ref, b_ref, o_ref, acc_ref):
    k = pl.program_id(2)
    nk = pl.num_programs(2)
    partial = jnp.dot(x_ref[...], w_ref[...], preferred_element_type=jnp.float32)

    @pl.when(k == 0)
    def _():
        acc_ref[...] = partial

    @pl.when(jnp.logical_and(k > 0, k < nk - 1))
    def _():
        acc_ref[...] += partial

    @pl.when(k == nk - 1)
    def _():
        y = acc_ref[...] + partial + b_ref[...].astype(jnp.float32)
        o_ref[...] = jnp.maximum(y, 0.0).astype(o_ref.dtype)


# --------------------------------- helpers ---------------------------------

def _round_up(v, m):
    return ((v + m - 1) // m) * m


def _sublane(dtype):
    # Packed sublane multiple: 8 for 32-bit, 16 for 16-bit, 32 for 8-bit.
    return {4: 8, 2: 16, 1: 32}.get(jnp.dtype(dtype).itemsize, 8)


def _vmem_capacity_bytes():
    # Generation-aware VMEM capacity (128 MiB v5e/v6e, 64 MiB v7x).  Fall back
    # to the smallest generation's capacity if the query is unavailable.
    try:
        cap = int(pltpu.get_tpu_info().vmem_capacity_bytes)
        if cap > 0:
            return cap
    except Exception:
        pass
    return 64 * 1024 * 1024


# --------------------------------- wrapper ---------------------------------

@functools.partial(jax.jit,
                   static_argnames=("tm", "tn", "tk", "weight_resident"))
def propagator_forward(x, w_t, b, res=None, *,
                       tm=None, tn=None, tk=None, weight_resident=None):
    """relu(x @ w_t + b [+ res]) matching the PyTorch Propagator.forward.

    x:   [..., input_size]
    w_t: [input_size, output_size]     (transpose of nn.Linear.weight)
    b:   [output_size]
    res: optional, [..., output_size]  (same total leading size as x)
    weight_resident: None = auto, True/False = force path selection.
    """
    in_shape = x.shape
    K = in_shape[-1]
    N = w_t.shape[-1]
    M = 1
    for d in in_shape[:-1]:
        M *= d

    x2d = x.reshape(M, K)
    b2d = b.reshape(1, N)
    r2d = res.reshape(M, N) if res is not None else None

    xb = jnp.dtype(x.dtype).itemsize
    wb = jnp.dtype(w_t.dtype).itemsize
    bb = jnp.dtype(b.dtype).itemsize
    rb = jnp.dtype(res.dtype).itemsize if res is not None else 0
    ob = xb
    sub = _sublane(x.dtype)

    vmem_cap = _vmem_capacity_bytes()
    budget = int(vmem_cap * 0.6)          # tile working-set budget
    vmem_limit = int(vmem_cap * 0.75)     # scoped limit: headroom on v7x

    cost = pl.CostEstimate(
        flops=2 * M * N * K,
        transcendentals=0,
        bytes_accessed=(M * K * xb + K * N * wb + N * bb
                        + M * N * rb + M * N * ob),
    )
    out_dtype = x.dtype
    out_shape = jax.ShapeDtypeStruct((M, N), out_dtype)
    out_nd = tuple(in_shape[:-1]) + (N,)
    compiler_params = lambda dims: pltpu.CompilerParams(
        dimension_semantics=dims, vmem_limit_bytes=vmem_limit)

    # ---------------- path selection: weight-resident vs tiled ----------------
    w_res_bytes = 2 * K * N * wb + 2 * N * bb          # W + bias (2 buffers)
    row_bytes = 2 * (K * xb + N * rb + N * ob)         # streamed bytes per M row
    tm_cap = ((budget - w_res_bytes) // max(row_bytes, 1) // sub) * sub
    use_wres = (w_res_bytes <= budget // 2) and (tm_cap >= sub)
    if weight_resident is not None:
        use_wres = bool(weight_resident)

    if use_wres:
        # ---- weight-resident: grid over M only; W/bias fetched once ----
        tm_w = 512 if tm is None else tm
        tm_w = min(tm_w, max(tm_cap, sub), _round_up(M, sub))
        tm_w = max(sub, (tm_w // sub) * sub)
        gm = pl.cdiv(M, tm_w)
        # Megacore (v7x): make sure the parallel M axis has >= 2 blocks.
        if gm == 1 and _round_up(M, sub) >= 2 * sub:
            tm_w = max(sub, _round_up((M + 1) // 2, sub))
            gm = pl.cdiv(M, tm_w)

        x_spec = pl.BlockSpec((tm_w, K), lambda i: (i, 0))
        w_spec = pl.BlockSpec((K, N), lambda i: (0, 0))     # constant: one DMA
        b_spec = pl.BlockSpec((1, N), lambda i: (0, 0))     # constant: one DMA
        o_spec = pl.BlockSpec((tm_w, N), lambda i: (i, 0))
        if res is not None:
            r_spec = pl.BlockSpec((tm_w, N), lambda i: (i, 0))
            kernel = _kernel_fast_res
            operands = (x2d, w_t, b2d, r2d)
            in_specs = [x_spec, w_spec, b_spec, r_spec]
        else:
            kernel = _kernel_fast_nores
            operands = (x2d, w_t, b2d)
            in_specs = [x_spec, w_spec, b_spec]

        out2d = pl.pallas_call(
            kernel,
            out_shape=out_shape,
            grid_spec=pltpu.PrefetchScalarGridSpec(
                num_scalar_prefetch=0,
                grid=(gm,),
                in_specs=in_specs,
                out_specs=o_spec,
            ),
            compiler_params=compiler_params(("parallel",)),
            cost_estimate=cost,
        )(*operands)
        return out2d.reshape(out_nd)

    # ---------------- fallback: tiled (M, N, K) path for huge K*N ----------------
    _tm = 256 if tm is None else tm
    _tn = 256 if tn is None else tn
    _tk = 512 if tk is None else tk
    _tm = max(sub, min((_tm // sub) * sub, _round_up(M, sub)))
    _tn = max(128, min(_round_up(_tn, 128), _round_up(N, 128)))
    _tk = max(128, min(_round_up(_tk, 128), _round_up(K, 128)))

    def vbytes(a, bn, c):
        return (2 * (a * c * xb + c * bn * wb + bn * bb + a * bn * rb)
                + 2 * a * bn * ob + a * bn * 4)

    # Shrink tm first (also shrinks the f32 accumulator); keep tk/tn >= 256
    # where possible (256x256 MXU on v6e/v7x), then allow 128.
    while vbytes(_tm, _tn, _tk) > budget:
        if _tm > 128:
            _tm = max(128, ((_tm // 2) // sub) * sub)
        elif _tk > 256:
            _tk = max(256, _round_up(_tk // 2, 128))
        elif _tn > 256:
            _tn = max(256, _round_up(_tn // 2, 128))
        elif _tk > 128:
            _tk = 128
        elif _tn > 128:
            _tn = 128
        elif _tm > sub:
            _tm = max(sub, ((_tm // 2) // sub) * sub)
        else:
            break

    # Prefer a tk that divides K exactly so x/W need no K padding.
    if K % _tk != 0:
        for cand in (512, 384, 256, 128):
            if cand <= _tk and K % cand == 0:
                _tk = cand
                break

    gm = pl.cdiv(M, _tm)
    gn = pl.cdiv(N, _tn)
    gk = pl.cdiv(K, _tk)

    if gk == 1:
        # Single reduction step: full-K blocks (no padding), 2-D parallel grid.
        x_spec = pl.BlockSpec((_tm, K), lambda i, j: (i, 0))
        w_spec = pl.BlockSpec((K, _tn), lambda i, j: (0, j))
        b_spec = pl.BlockSpec((1, _tn), lambda i, j: (0, j))
        o_spec = pl.BlockSpec((_tm, _tn), lambda i, j: (i, j))
        grid = (gm, gn)
        dims = ("parallel", "parallel")
        scratch = []
        x_in, w_in = x2d, w_t
        if res is not None:
            r_spec = pl.BlockSpec((_tm, _tn), lambda i, j: (i, j))
            kernel = _kernel_fast_res
            operands = (x_in, w_in, b2d, r2d)
            in_specs = [x_spec, w_spec, b_spec, r_spec]
        else:
            kernel = _kernel_fast_nores
            operands = (x_in, w_in, b2d)
            in_specs = [x_spec, w_spec, b_spec]
    else:
        # Multi-step reduction with resident f32 accumulator.  Only K is ever
        # zero-padded (required for accumulation correctness); M/N edges rely
        # on Pallas' masked edge blocks.
        Kp = gk * _tk
        x_in = x2d if Kp == K else jnp.pad(x2d, ((0, 0), (0, Kp - K)))
        w_in = w_t if Kp == K else jnp.pad(w_t, ((0, Kp - K), (0, 0)))
        x_spec = pl.BlockSpec((_tm, _tk), lambda i, j, k: (i, k))
        w_spec = pl.BlockSpec((_tk, _tn), lambda i, j, k: (k, j))
        b_spec = pl.BlockSpec((1, _tn), lambda i, j, k: (0, j))
        o_spec = pl.BlockSpec((_tm, _tn), lambda i, j, k: (i, j))
        grid = (gm, gn, gk)
        dims = ("parallel", "parallel", "arbitrary")
        scratch = [pltpu.VMEM((_tm, _tn), jnp.float32)]
        if res is not None:
            r_spec = pl.BlockSpec((_tm, _tn), lambda i, j, k: (i, j))
            kernel = _kernel_acc_res
            operands = (x_in, w_in, b2d, r2d)
            in_specs = [x_spec, w_spec, b_spec, r_spec]
        else:
            kernel = _kernel_acc_nores
            operands = (x_in, w_in, b2d)
            in_specs = [x_spec, w_spec, b_spec]

    out2d = pl.pallas_call(
        kernel,
        out_shape=out_shape,
        grid_spec=pltpu.PrefetchScalarGridSpec(
            num_scalar_prefetch=0,
            grid=grid,
            in_specs=in_specs,
            out_specs=o_spec,
            scratch_shapes=scratch,
        ),
        compiler_params=compiler_params(dims),
        cost_estimate=cost,
    )(*operands)
    return out2d.reshape(out_nd)


# -------------------------------- reference --------------------------------

def _reference(x, w_t, b, res=None):
    s = x.shape
    y = x.reshape(-1, s[-1]) @ w_t + b
    if res is not None:
        y = y + res.reshape(-1, w_t.shape[-1])
    return jnp.maximum(y, 0.0).reshape(tuple(s[:-1]) + (w_t.shape[-1],))


if __name__ == "__main__":
    batch, seq = 2, 8
    input_size, output_size = 256, 128

    key = jax.random.PRNGKey(0)
    kx, kw, kb, kr = jax.random.split(key, 4)

    x = jax.random.normal(kx, (batch, seq, input_size), dtype=jnp.float32)
    # Deterministic "nn.Linear"-style params (synthetic, not a checkpoint load).
    w = jax.random.normal(kw, (output_size, input_size), dtype=jnp.float32) * 0.05
    b = jax.random.normal(kb, (output_size,), dtype=jnp.float32) * 0.05
    res = jax.random.normal(kr, (batch, seq, output_size), dtype=jnp.float32)
    w_t = w.T  # (input_size, output_size)

    # Path 1: weight-resident, with residual.
    out = jax.block_until_ready(propagator_forward(x, w_t, b, res))
    ref = _reference(x, w_t, b, res)
    assert out.shape == (batch, seq, output_size)
    assert jnp.allclose(out, ref, atol=1e-4, rtol=1e-4)

    # Path 2: weight-resident, res=None (no dense zero tensor streamed).
    out2 = jax.block_until_ready(propagator_forward(x, w_t, b, None))
    ref2 = _reference(x, w_t, b, None)
    assert jnp.allclose(out2, ref2, atol=1e-4, rtol=1e-4)

    # Path 3: ragged everything (M=15, K=200, N=96) — weight-resident path with
    # masked edge blocks, no padding / slicing anywhere.
    k3 = jax.random.split(jax.random.PRNGKey(1), 4)
    x3 = jax.random.normal(k3[0], (3, 5, 200), dtype=jnp.float32)
    w3 = jax.random.normal(k3[1], (96, 200), dtype=jnp.float32) * 0.05
    b3 = jax.random.normal(k3[2], (96,), dtype=jnp.float32) * 0.05
    r3 = jax.random.normal(k3[3], (3, 5, 96), dtype=jnp.float32)
    out3 = jax.block_until_ready(propagator_forward(x3, w3.T, b3, r3))
    ref3 = _reference(x3, w3.T, b3, r3)
    assert out3.shape == (3, 5, 96)
    assert jnp.allclose(out3, ref3, atol=1e-4, rtol=1e-4)

    # Path 4: forced tiled fallback with multi-step K reduction (gk=4) and an
    # N edge block (N=96 < tn=128) — exercises the accumulator kernel.
    k4 = jax.random.split(jax.random.PRNGKey(2), 3)
    x4 = jax.random.normal(k4[0], (batch, seq, 512), dtype=jnp.float32)
    w4 = jax.random.normal(k4[1], (96, 512), dtype=jnp.float32) * 0.05
    b4 = jax.random.normal(k4[2], (96,), dtype=jnp.float32) * 0.05
    out4 = jax.block_until_ready(
        propagator_forward(x4, w4.T, b4, None, tk=128, weight_resident=False))
    ref4 = _reference(x4, w4.T, b4, None)
    assert out4.shape == (batch, seq, 96)
    assert jnp.allclose(out4, ref4, atol=1e-4, rtol=1e-4)

    # Path 5: forced tiled fallback, single K step (gk=1, 2-D parallel grid).
    out5 = jax.block_until_ready(
        propagator_forward(x, w_t, b, res, tk=256, weight_resident=False))
    assert jnp.allclose(out5, ref, atol=1e-4, rtol=1e-4)

    print("KERNEL_OK")
</pallas_src>

<mosaic_0001>
module attributes {stable_mosaic.version = 11 : i64} {
  func.func @_kernel_fast_res(%arg0: i32, %arg1: memref<8x256xf32, #tpu.memory_space<vmem>>, %arg2: memref<256x128xf32, #tpu.memory_space<vmem>>, %arg3: memref<1x128xf32, #tpu.memory_space<vmem>>, %arg4: memref<8x128xf32, #tpu.memory_space<vmem>>, %arg5: memref<8x128xf32, #tpu.memory_space<vmem>>) attributes {dimension_semantics = [#tpu.dimension_semantics<parallel>], iteration_bounds = array<i64: 2>, scalar_prefetch = 0 : i64, scratch_operands = 0 : i64, tpu.core_type = #tpu.core_type<tc>, window_params = [{transform_indices = @transform_0, window_bounds = array<i64: 8, 256>}, {pipeline_mode = #tpu.pipeline_mode<synchronous>, transform_indices = @transform_1, window_bounds = array<i64: 256, 128>}, {pipeline_mode = #tpu.pipeline_mode<synchronous>, transform_indices = @transform_2, window_bounds = array<i64: 1, 128>}, {transform_indices = @transform_3, window_bounds = array<i64: 8, 128>}, {transform_indices = @transform_4, window_bounds = array<i64: 8, 128>}]} {
    %c0 = arith.constant 0 : index
    %c0_0 = arith.constant 0 : index
    %0 = vector.load %arg1[%c0, %c0_0] : memref<8x256xf32, #tpu.memory_space<vmem>>, vector<8x256xf32>
    %c0_1 = arith.constant 0 : index
    %c0_2 = arith.constant 0 : index
    %1 = vector.load %arg2[%c0_1, %c0_2] : memref<256x128xf32, #tpu.memory_space<vmem>>, vector<256x128xf32>
    %cst = arith.constant dense<0.000000e+00> : vector<8x128xf32>
    %2 = tpu.matmul %0, %1, %cst {dimension_numbers = #tpu.dot_dimension_numbers<[1], [0], [0], [1], [0, 0, 1, 1], [], []>} : vector<8x256xf32>, vector<256x128xf32>, vector<8x128xf32> -> vector<8x128xf32>
    %c0_3 = arith.constant 0 : index
    %c0_4 = arith.constant 0 : index
    %3 = vector.load %arg3[%c0_3, %c0_4] : memref<1x128xf32, #tpu.memory_space<vmem>>, vector<1x128xf32>
    %4 = vector.broadcast %3 : vector<1x128xf32> to vector<8x128xf32>
    %5 = arith.addf %2, %4 : vector<8x128xf32>
    %c0_5 = arith.constant 0 : index
    %c0_6 = arith.constant 0 : index
    %6 = vector.load %arg4[%c0_5, %c0_6] : memref<8x128xf32, #tpu.memory_space<vmem>>, vector<8x128xf32>
    %7 = arith.addf %5, %6 : vector<8x128xf32>
    %cst_7 = arith.constant 0.000000e+00 : f32
    %8 = vector.broadcast %cst_7 : f32 to vector<8x128xf32>
    %9 = arith.maximumf %7, %8 : vector<8x128xf32>
    %c0_8 = arith.constant 0 : index
    %c0_9 = arith.constant 0 : index
    %10 = vector.load %arg5[%c0_8, %c0_9] : memref<8x128xf32, #tpu.memory_space<vmem>>, vector<8x128xf32>
    tpu.vector_store %arg5[%c0_8, %c0_9], %9 {strides = array<i32>} : memref<8x128xf32, #tpu.memory_space<vmem>>, vector<8x128xf32>,
    return
  }
  func.func @transform_0(%arg0: i32) -> (i32, i32) {
    %c0_i32 = arith.constant 0 : i32
    %c0_i32_0 = arith.constant 0 : i32
    return %arg0, %c0_i32 : i32, i32
  }
  func.func @transform_1(%arg0: i32) -> (i32, i32) {
    %c0_i32 = arith.constant 0 : i32
    %c0_i32_0 = arith.constant 0 : i32
    %c0_i32_1 = arith.constant 0 : i32
    return %c0_i32, %c0_i32_0 : i32, i32
  }
  func.func @transform_2(%arg0: i32) -> (i32, i32) {
    %c0_i32 = arith.constant 0 : i32
    %c0_i32_0 = arith.constant 0 : i32
    %c0_i32_1 = arith.constant 0 : i32
    return %c0_i32, %c0_i32_0 : i32, i32
  }
  func.func @transform_3(%arg0: i32) -> (i32, i32) {
    %c0_i32 = arith.constant 0 : i32
    %c0_i32_0 = arith.constant 0 : i32
    return %arg0, %c0_i32 : i32, i32
  }
  func.func @transform_4(%arg0: i32) -> (i32, i32) {
    %c0_i32 = arith.constant 0 : i32
    %c0_i32_0 = arith.constant 0 : i32
    return %arg0, %c0_i32 : i32, i32
  }
}

</mosaic_0001>

<llo_original>
// kernel: propagator_forward.1
$region0: #{propagator_forward.1}
  #allocation0 [shape = 'u32[]', space=smem, size = 0x4, offset = 0x4, fixed_abs, tag = 'smem constant byte address 0x4 - core index']
  #allocation1 [shape = 'u32[144,128]{1,0:T(1,128)}', space=vmem, size = 0x12000, scoped, tag = 'internal scratch']
  %s0 = inlined_call_operand.hbm [shape: f32[16,256], index: 0, kind: input, shape index: {}]
  %s1 = inlined_call_operand.hbm [shape: f32[256,128], index: 1, kind: input, shape index: {}]
  %s2 = inlined_call_operand.vmem [shape: f32[1,128], index: 2, kind: input, shape index: {}]
  %s3 = inlined_call_operand.vmem [shape: f32[16,128], index: 3, kind: input, shape index: {}]
  %s4 = inlined_call_operand.hbm [shape: f32[16,128], index: 4, kind: output, shape index: {}]
  %s5 = sld [smem:[#allocation0]]
  $region57: #{propagator_forward.1} parent=0
    _
  %s7 = ssub.s32 1, %s5
  %s8 = scalar_select 0, %s7, %s5
  $region1: #{propagator_forward.1} parent=0
    #allocation2 [shape = 'u8[16384]{0}', space=vmem, size = 0x4000, scoped, tag = 'input window, operand 0']
    #allocation3 [shape = 's32[2]{0}', space=sflag, size = 0x8, scoped, tag = 'scoped memory for propagator_forward.1']
    #allocation4 [shape = 's32[2]{0}', space=sflag, size = 0x8, scoped, tag = 'scoped memory for propagator_forward.1']
    #allocation5 [shape = 'u8[131072]{0}', space=vmem, size = 0x20000, scoped, tag = 'input window, operand 1, single buffered']
    #allocation6 [shape = 's32[1]{0}', space=sflag, size = 0x4, scoped, tag = 'scoped memory for propagator_forward.1']
    #allocation7 [shape = 'u8[8192]{0}', space=vmem, size = 0x2000, scoped, tag = 'output window, operand 0']
    %9 = vsyncpa [#allocation3], 0
    %s10 = scalar_lea.sflag [#allocation3], 1
    %11 = vsyncpa %s10, 0
    %12 = vsyncpa [#allocation6], 0
    %13 = vsyncpa [#allocation4], 0
    %s14 = scalar_lea.sflag [#allocation4], 1
    %15 = vsyncpa %s14, 0
    loop: start=0, step=1, limit=4
    $region2: #{propagator_forward.1} parent=1 // loop_pre_header
      _
    $region3: #{propagator_forward.1} parent=1 // loop_header
      %s17 = sphi 0, %s21
      %p18 = scmp.ge.s32.totalorder %s17, 4
      %s27 = sphi 0, %s29
      %s30 = sphi 0, %s27
      %s31 = sphi 0, %s30
      %s47 = sphi 0, %s31
      %s51 = sphi 0, %s51
      %s53 = sphi 0, %s51
      %s54 = sphi 0, %s53
      %s68 = sphi 0, %s54
      %s72 = sphi 0, %s72
      %s74 = sphi 0, %s72
      %s75 = sphi 0, %s74
      %s89 = sphi 0, %s75
      %s95 = sphi 0, %s97
      %s98 = sphi 0, %s95
      %s99 = sphi 0, %s98
      %s115 = sphi 0, %s99
      %s121 = sphi 0, %s123
      %s124 = sphi 0, %s121
      %s125 = sphi 0, %s124
      %s141 = sphi 0, %s125
    $region4: #{propagator_forward.1} parent=1 // loop_header_branch
      %20 = sbr.rel (%p18) target = $region8
    $region5: #{propagator_forward.1} parent=1 // loop_body
      %s22 = ssub.s32 %s17, 1
      %s23 = ssub.s32 %s17, 2
      %s24 = sadd.s32 %s17, 1
      %s25 = ssub.s32 %s17, %s24
      %p26 = scmp.eq.s32.totalorder %s25, 0
      %s28 = sadd.s32 %s27, 1
      %s29 = scalar_select %p26, %s27, %s28
      %p32 = pneg %p26
      %p33 = scmp.eq.s32.totalorder %s17, 1
      %p34 = por %p32, %p33
      %p35 = scmp.ne.s32.totalorder %s27, %s30
      %p36 = scmp.eq.s32.totalorder %s17, 0
      %p37 = por %p35, %p36
      %p38 = scmp.ne.s32.totalorder %s27, %s30
      %p39 = scmp.eq.s32.totalorder %s22, 1
      %p40 = por %p38, %p39
      %p41 = scmp.ne.s32.totalorder %s30, %s31
      %p42 = scmp.eq.s32.totalorder %s22, 0
      %p43 = por %p41, %p42
      %p44 = scmp.ne.s32.totalorder %s30, %s31
      %p45 = scmp.eq.s32.totalorder %s23, 1
      %p46 = por %p44, %p45
      %p48 = scmp.ne.s32.totalorder %s31, %s47
      %p49 = scmp.eq.s32.totalorder %s23, 0
      %p50 = por %p48, %p49
      %s52 = sadd.s32 %s51, 1
      %p55 = scmp.eq.s32.totalorder %s17, 1
      %p56 = scmp.ne.s32.totalorder %s51, %s53
      %p57 = scmp.eq.s32.totalorder %s17, 0
      %p58 = por %p56, %p57
      %p59 = scmp.ne.s32.totalorder %s51, %s53
      %p60 = scmp.eq.s32.totalorder %s22, 1
      %p61 = por %p59, %p60
      %p62 = scmp.ne.s32.totalorder %s53, %s54
      %p63 = scmp.eq.s32.totalorder %s22, 0
      %p64 = por %p62, %p63
      %p65 = scmp.ne.s32.totalorder %s53, %s54
      %p66 = scmp.eq.s32.totalorder %s23, 1
      %p67 = por %p65, %p66
      %p69 = scmp.ne.s32.totalorder %s54, %s68
      %p70 = scmp.eq.s32.totalorder %s23, 0
      %p71 = por %p69, %p70
      %s73 = sadd.s32 %s72, 1
      %p76 = scmp.eq.s32.totalorder %s17, 1
      %p77 = scmp.ne.s32.totalorder %s72, %s74
      %p78 = scmp.eq.s32.totalorder %s17, 0
      %p79 = por %p77, %p78
      %p80 = scmp.ne.s32.totalorder %s72, %s74
      %p81 = scmp.eq.s32.totalorder %s22, 1
      %p82 = por %p80, %p81
      %p83 = scmp.ne.s32.totalorder %s74, %s75
      %p84 = scmp.eq.s32.totalorder %s22, 0
      %p85 = por %p83, %p84
      %p86 = scmp.ne.s32.totalorder %s74, %s75
      %p87 = scmp.eq.s32.totalorder %s23, 1
      %p88 = por %p86, %p87
      %p90 = scmp.ne.s32.totalorder %s75, %s89
      %p91 = scmp.eq.s32.totalorder %s23, 0
      %p92 = por %p90, %p91
      %s93 = ssub.s32 %s17, %s24
      %p94 = scmp.eq.s32.totalorder %s93, 0
      %s96 = sadd.s32 %s95, 1
      %s97 = scalar_select %p94, %s95, %s96
      %p100 = pneg %p94
      %p101 = scmp.eq.s32.totalorder %s17, 1
      %p102 = por %p100, %p101
      %p103 = scmp.ne.s32.totalorder %s95, %s98
      %p104 = scmp.eq.s32.totalorder %s17, 0
      %p105 = por %p103, %p104
      %p106 = scmp.ne.s32.totalorder %s95, %s98
      %p107 = scmp.eq.s32.totalorder %s22, 1
      %p108 = por %p106, %p107
      %p109 = scmp.ne.s32.totalorder %s98, %s99
      %p110 = scmp.eq.s32.totalorder %s22, 0
      %p111 = por %p109, %p110
      %p112 = scmp.ne.s32.totalorder %s98, %s99
      %p113 = scmp.eq.s32.totalorder %s23, 1
      %p114 = por %p112, %p113
      %p116 = scmp.ne.s32.totalorder %s99, %s115
      %p117 = scmp.eq.s32.totalorder %s23, 0
      %p118 = por %p116, %p117
      %s119 = ssub.s32 %s17, %s24
      %p120 = scmp.eq.s32.totalorder %s119, 0
      %s122 = sadd.s32 %s121, 1
      %s123 = scalar_select %p120, %s121, %s122
      %p126 = pneg %p120
      %p127 = scmp.eq.s32.totalorder %s17, 1
      %p128 = por %p126, %p127
      %p129 = scmp.ne.s32.totalorder %s121, %s124
      %p130 = scmp.eq.s32.totalorder %s17, 0
      %p131 = por %p129, %p130
      %p132 = scmp.ne.s32.totalorder %s121, %s124
      %p133 = scmp.eq.s32.totalorder %s22, 1
      %p134 = por %p132, %p133
      %p135 = scmp.ne.s32.totalorder %s124, %s125
      %p136 = scmp.eq.s32.totalorder %s22, 0
      %p137 = por %p135, %p136
      %p138 = scmp.ne.s32.totalorder %s124, %s125
      %p139 = scmp.eq.s32.totalorder %s23, 1
      %p140 = por %p138, %p139
      %p142 = scmp.ne.s32.totalorder %s125, %s141
      %p143 = scmp.eq.s32.totalorder %s23, 0
      %p144 = por %p142, %p143
      %p145 = scmp.le.s32.totalorder 1, %s17
      %p146 = scmp.lt.s32.totalorder %s17, 3
      %p147 = pnand %p145, %p146
      %p148 = pneg %p147
      // Predicated region
      $region9: #{propagator_forward.1} parent=5 // pred_check
        _
      $region10: #{propagator_forward.1} parent=5 // pred_check_branch
        %150 = sbr.rel (%p147) target = $region12
      $region11: #{propagator_forward.1} parent=5 // pred_region
        %s151 = ssub.s32 %s17, 1
        // Predicated region
        $region13: #{propagator_forward.1} parent=11 // pred_check
          %p152 = pneg %p64
        $region14: #{propagator_forward.1} parent=11 // pred_check_branch
          %154 = sbr.rel (%p152) target = $region16
        $region15: #{propagator_forward.1} parent=11 // pred_region
          %s156 = ssub.s32 4096, 4096
          %157 = vsyncadd [#allocation6], %s156
          %s158 = sshll.u32 [#allocation5], 4
          %s159 = int_to_ptr.vmem [resolvable:$true] %s158
          %164 = dma.hbm_to_vmem [thread:$0]  %s1, 4096, %s159, [#allocation6], 128, 128, 8
        $region16: #{propagator_forward.1} parent=11 // pred_fallthru
          _
        // Predicated region
        $region17: #{propagator_forward.1} parent=11 // pred_check
          %p165 = pneg %p85
        $region18: #{propagator_forward.1} parent=11 // pred_check_branch
          %167 = sbr.rel (%p165) target = $region20
        $region19: #{propagator_forward.1} parent=11 // pred_region
          _
        $region20: #{propagator_forward.1} parent=11 // pred_fallthru
          _
      $region12: #{propagator_forward.1} parent=5 // pred_fallthru
        _
      %p168 = scmp.lt.s32.totalorder %s17, 2
      // Predicated region
      $region21: #{propagator_forward.1} parent=5 // pred_check
        %p169 = pneg %p168
      $region22: #{propagator_forward.1} parent=5 // pred_check_branch
        %171 = sbr.rel (%p169) target = $region24
      $region23: #{propagator_forward.1} parent=5 // pred_region
        // Predicated region
        $region25: #{propagator_forward.1} parent=23 // pred_check
          %p172 = pneg %p37
        $region26: #{propagator_forward.1} parent=23 // pred_check_branch
          %174 = sbr.rel (%p172) target = $region28
        $region27: #{propagator_forward.1} parent=23 // pred_region
          %s175 = sand.u32 %s27, 1
          %s176 = scalar_lea.sflag [#allocation3], %s175
          %s177 = sand.u32 %s27, 1
          %s178 = smul.addr %s177, 16
          %s179 = scalar_lea.vmem [#allocation2], %s178
          %s181 = ssub.s32 256, 256
          %182 = vsyncadd %s176, %s181
          %s183 = smul.addr %s17, 2
          %s184 = smul.addr %s183, 128
          %s185 = scalar_lea.hbm %s0, %s184
          %s187 = sshll.u32 %s179, 4
          %s188 = int_to_ptr.vmem [resolvable:$true] %s187
          %190 = dma.hbm_to_vmem [thread:$0]  %s185, 256, %s188, %s176
        $region28: #{propagator_forward.1} parent=23 // pred_fallthru
          _
        // Predicated region
        $region29: #{propagator_forward.1} parent=23 // pred_check
          %p191 = pneg %p105
        $region30: #{propagator_forward.1} parent=23 // pred_check_branch
          %193 = sbr.rel (%p191) target = $region32
        $region31: #{propagator_forward.1} parent=23 // pred_region
          %p194 = scmp.lt.s32.totalorder %s17, 1
          %s195 = scalar_select %p194, %s17, 1
          %s196 = smul.addr %s195, 8
          %s197 = scalar_lea.vmem %s3, %s196
        $region32: #{propagator_forward.1} parent=23 // pred_fallthru
          _
      $region24: #{propagator_forward.1} parent=5 // pred_fallthru
        _
      %p198 = scmp.le.s32.totalorder 1, %s17
      %p199 = scmp.lt.s32.totalorder %s17, 3
      %p200 = pnand %p198, %p199
      %p201 = pneg %p200
      // Predicated region
      $region33: #{propagator_forward.1} parent=5 // pred_check
        _
      $region34: #{propagator_forward.1} parent=5 // pred_check_branch
        %203 = sbr.rel (%p200) target = $region36
      $region35: #{propagator_forward.1} parent=5 // pred_region
        %s204 = ssub.s32 %s17, 1
        %s205 = sand.u32 %s30, 1
        %s206 = scalar_lea.sflag [#allocation3], %s205
        %s207 = sand.u32 %s30, 1
        %s208 = smul.addr %s207, 16
        %s209 = scalar_lea.vmem [#allocation2], %s208
        // Predicated region
        $region37: #{propagator_forward.1} parent=35 // pred_check
          %p210 = pneg %p43
        $region38: #{propagator_forward.1} parent=35 // pred_check_branch
          %212 = sbr.rel (%p210) target = $region40
        $region39: #{propagator_forward.1} parent=35 // pred_region
          %213 = dma.done %s206, 256
        $region40: #{propagator_forward.1} parent=35 // pred_fallthru
          _
        // Predicated region
        $region41: #{propagator_forward.1} parent=35 // pred_check
          %p214 = pneg %p64
        $region42: #{propagator_forward.1} parent=35 // pred_check_branch
          %216 = sbr.rel (%p214) target = $region44
        $region43: #{propagator_forward.1} parent=35 // pred_region
          %217 = dma.done [#allocation6], 4096
        $region44: #{propagator_forward.1} parent=35 // pred_fallthru
          _
        %s218 = sand.u32 %s30, 1
        %s219 = scalar_lea.sflag [#allocation3], %s218
        %s220 = sand.u32 %s30, 1
        %s221 = smul.addr %s220, 16
        %s222 = scalar_lea.vmem [#allocation2], %s221
        %p223 = pneg %p43
        %p224 = pneg %p40
        %p225 = pneg %p64
        %p226 = pneg %p61
        %p227 = pneg %p85
        %p228 = pneg %p82
        %p229 = scmp.lt.s32.totalorder %s22, 1
        %s230 = scalar_select %p229, %s22, 1
        %s231 = smul.addr %s230, 8
        %s232 = scalar_lea.vmem %s3, %s231
        %p233 = pneg %p111
        %p234 = pneg %p108
        %p235 = pneg %p137
        %p236 = pneg %p134
        %s237 = sand.u32 %s124, 1
        %s238 = scalar_lea.sflag [#allocation4], %s237
        %s239 = sand.u32 %s124, 1
        %s240 = smul.addr %s239, 8
        %s241 = scalar_lea.vmem [#allocation7], %s240
        %p242 = scmp.lt.s32.totalorder %s22, 1
        %s243 = scalar_select %p242, %s22, 1
        %s244 = smul.addr %s243, 8
        %s245 = scalar_lea.vmem %s3, %s244
        %v246 = vld [vmem:[%s209] sm:$0xff]
        %v247 = vld [vmem:[%s209 + $0x8] sm:$0xff]
        %v248 = vld [vmem:[#allocation5] sm:$0xff]
        %v249 = vld [vmem:[#allocation5 + $0x8] sm:$0xff]
        %v250 = vld [vmem:[#allocation5 + $0x10] sm:$0xff]
        %v251 = vld [vmem:[#allocation5 + $0x18] sm:$0xff]
        %v252 = vld [vmem:[#allocation5 + $0x20] sm:$0xff]
        %v253 = vld [vmem:[#allocation5 + $0x28] sm:$0xff]
        %v254 = vld [vmem:[#allocation5 + $0x30] sm:$0xff]
        %v255 = vld [vmem:[#allocation5 + $0x38] sm:$0xff]
        %v256 = vld [vmem:[#allocation5 + $0x40] sm:$0xff]
        %v257 = vld [vmem:[#allocation5 + $0x48] sm:$0xff]
        %v258 = vld [vmem:[#allocation5 + $0x50] sm:$0xff]
        %v259 = vld [vmem:[#allocation5 + $0x58] sm:$0xff]
        %v260 = vld [vmem:[#allocation5 + $0x60] sm:$0xff]
        %v261 = vld [vmem:[#allocation5 + $0x68] sm:$0xff]
        %v262 = vld [vmem:[#allocation5 + $0x70] sm:$0xff]
        %v263 = vld [vmem:[#allocation5 + $0x78] sm:$0xff]
        %v264 = vld [vmem:[#allocation5 + $0x80] sm:$0xff]
        %v265 = vld [vmem:[#allocation5 + $0x88] sm:$0xff]
        %v266 = vld [vmem:[#allocation5 + $0x90] sm:$0xff]
        %v267 = vld [vmem:[#allocation5 + $0x98] sm:$0xff]
        %v268 = vld [vmem:[#allocation5 + $0xa0] sm:$0xff]
        %v269 = vld [vmem:[#allocation5 + $0xa8] sm:$0xff]
        %v270 = vld [vmem:[#allocation5 + $0xb0] sm:$0xff]
        %v271 = vld [vmem:[#allocation5 + $0xb8] sm:$0xff]
        %v272 = vld [vmem:[#allocation5 + $0xc0] sm:$0xff]
        %v273 = vld [vmem:[#allocation5 + $0xc8] sm:$0xff]
        %v274 = vld [vmem:[#allocation5 + $0xd0] sm:$0xff]
        %v275 = vld [vmem:[#allocation5 + $0xd8] sm:$0xff]
        %v276 = vld [vmem:[#allocation5 + $0xe0] sm:$0xff]
        %v277 = vld [vmem:[#allocation5 + $0xe8] sm:$0xff]
        %v278 = vld [vmem:[#allocation5 + $0xf0] sm:$0xff]
        %v279 = vld [vmem:[#allocation5 + $0xf8] sm:$0xff]
        %v280 = vld [vmem:[%s2] sm:$0x1]
        %v282 = vlaneseq
        %v283 = vshrl.u32 %v282, 7
        %v284 = vsub.s32 0, %v283
        %v285 = vrot.slane %v280, %v284
        %287 = vmatprep.subr.mxu0 0.0
        %288 = vmatpush1.msra.mxu0 %v248
        %289 = vmatprep.subr.mxu0 0.0
        %290 = vmatpush1.msra.mxu0 %v249
        %291 = vmatprep.subr.mxu0 0.0
        %292 = vmatpush1.msra.mxu0 %v250
        %293 = vmatprep.subr.mxu0 0.0
        %294 = vmatpush1.msra.mxu0 %v251
        %295 = vmatprep.subr.mxu0 0.0
        %296 = vmatpush1.msra.mxu0 %v252
        %297 = vmatprep.subr.mxu0 0.0
        %298 = vmatpush1.msra.mxu0 %v253
        %299 = vmatprep.subr.mxu0 0.0
        %300 = vmatpush1.msra.mxu0 %v254
        %301 = vmatprep.subr.mxu0 0.0
        %302 = vmatpush1.msra.mxu0 %v255
        %303 = vmatprep.subr.mxu0 0.0
        %304 = vmatpush1.msra.mxu0 %v256
        %305 = vmatprep.subr.mxu0 0.0
        %306 = vmatpush1.msra.mxu0 %v257
        %307 = vmatprep.subr.mxu0 0.0
        %308 = vmatpush1.msra.mxu0 %v258
        %309 = vmatprep.subr.mxu0 0.0
        %310 = vmatpush1.msra.mxu0 %v259
        %311 = vmatprep.subr.mxu0 0.0
        %312 = vmatpush1.msra.mxu0 %v260
        %313 = vmatprep.subr.mxu0 0.0
        %314 = vmatpush1.msra.mxu0 %v261
        %315 = vmatprep.subr.mxu0 0.0
        %316 = vmatpush1.msra.mxu0 %v262
        %317 = vmatprep.subr.mxu0 0.0
        %318 = vmatpush1.msra.mxu0 %v263
        %319 = vmatprep.subr.mxu0 0.0
        %320 = vmatpush1.msra.mxu0 %v264
        %321 = vmatprep.subr.mxu0 0.0
        %322 = vmatpush1.msra.mxu0 %v265
        %323 = vmatprep.subr.mxu0 0.0
        %324 = vmatpush1.msra.mxu0 %v266
        %325 = vmatprep.subr.mxu0 0.0
        %326 = vmatpush1.msra.mxu0 %v267
        %327 = vmatprep.subr.mxu0 0.0
        %328 = vmatpush1.msra.mxu0 %v268
        %329 = vmatprep.subr.mxu0 0.0
        %330 = vmatpush1.msra.mxu0 %v269
        %331 = vmatprep.subr.mxu0 0.0
        %332 = vmatpush1.msra.mxu0 %v270
        %333 = vmatprep.subr.mxu0 0.0
        %334 = vmatpush1.msra.mxu0 %v271
        %335 = vmatprep.subr.mxu0 0.0
        %336 = vmatpush1.msra.mxu0 %v272
        %337 = vmatprep.subr.mxu0 0.0
        %338 = vmatpush1.msra.mxu0 %v273
        %339 = vmatprep.subr.mxu0 0.0
        %340 = vmatpush1.msra.mxu0 %v274
        %341 = vmatprep.subr.mxu0 0.0
        %342 = vmatpush1.msra.mxu0 %v275
        %343 = vmatprep.subr.mxu0 0.0
        %344 = vmatpush1.msra.mxu0 %v276
        %345 = vmatprep.subr.mxu0 0.0
        %346 = vmatpush1.msra.mxu0 %v277
        %347 = vmatprep.subr.mxu0 0.0
        %348 = vmatpush1.msra.mxu0 %v278
        %349 = vmatprep.subr.mxu0 0.0
        %350 = vmatpush1.msra.mxu0 %v279
        %351 = vmatprep.mubr.f32.mxu0 %v247
        %352 = vmatmul.mubr.f32.gmra.mrb[0].mxu0 %v246
        %v353 = vpop.f32.mrb[0].mxu0
        %v354 = vadd.f32 %v285, %v353
        %v355 = vpop.f32.mrb[0].mxu0
        %356 = vdwg.mxu0
        %v357 = vld [vmem:[%s245] sm:$0xff]
        %v358 = vadd.f32 %v354, %v357
        %v359 = vmax.f32 %v358, 0.0
        %360 = vst [vmem:[%s241] sm:$0xff] %v359
        %s361 = sand.u32 %s124, 1
        %s362 = scalar_lea.sflag [#allocation4], %s361
        %s363 = sand.u32 %s124, 1
        %s364 = smul.addr %s363, 8
        %s365 = scalar_lea.vmem [#allocation7], %s364
        // Predicated region
        $region45: #{propagator_forward.1} parent=35 // pred_check
          %p366 = pneg %p134
        $region46: #{propagator_forward.1} parent=35 // pred_check_branch
          %368 = sbr.rel (%p366) target = $region48
        $region47: #{propagator_forward.1} parent=35 // pred_region
          %s370 = ssub.s32 128, 128
          %371 = vsyncadd %s362, %s370
          %s372 = smul.addr %s22, 128
          %s373 = scalar_lea.hbm %s4, %s372
          %s375 = sshll.u32 %s365, 4
          %s376 = int_to_ptr.vmem [resolvable:$true] %s375
          %378 = dma.vmem_to_hbm [thread:$0]  %s376, 128, %s373, %s362
        $region48: #{propagator_forward.1} parent=35 // pred_fallthru
          _
      $region36: #{propagator_forward.1} parent=5 // pred_fallthru
        _
      %p379 = scmp.le.s32.totalorder 2, %s17
      // Predicated region
      $region49: #{propagator_forward.1} parent=5 // pred_check
        %p380 = pneg %p379
      $region50: #{propagator_forward.1} parent=5 // pred_check_branch
        %382 = sbr.rel (%p380) target = $region52
      $region51: #{propagator_forward.1} parent=5 // pred_region
        %s383 = ssub.s32 %s17, 2
        // Predicated region
        $region53: #{propagator_forward.1} parent=51 // pred_check
          %p384 = pneg %p140
        $region54: #{propagator_forward.1} parent=51 // pred_check_branch
          %386 = sbr.rel (%p384) target = $region56
        $region55: #{propagator_forward.1} parent=51 // pred_region
          %s387 = sand.u32 %s125, 1
          %s388 = scalar_lea.sflag [#allocation4], %s387
          %s389 = sand.u32 %s125, 1
          %s390 = smul.addr %s389, 8
          %s391 = scalar_lea.vmem [#allocation7], %s390
          %392 = dma.done %s388, 128
        $region56: #{propagator_forward.1} parent=51 // pred_fallthru
          _
      $region52: #{propagator_forward.1} parent=5 // pred_fallthru
        _
    $region6: #{propagator_forward.1} parent=1 // loop_footer
      %s21 = sadd.s32 1, %s17
    $region7: #{propagator_forward.1} parent=1 // loop_footer_branch
      %16 = sbr.rel target = $region3
    $region8: #{propagator_forward.1} parent=1 // loop_exit
      _
    %393 = vsyncpa [#allocation3], 1
    %s394 = scalar_lea.sflag [#allocation3], 1
    %395 = vsyncpa %s394, 1
    %396 = vsyncpa [#allocation6], 1
    %397 = vsyncpa [#allocation4], 1
    %s398 = scalar_lea.sflag [#allocation4], 1
    %399 = vsyncpa %s398, 1

</llo_original>
